<compile_context>
chip_gen: v7x
topology: tpu7x:2x2x1
jax: 0.10.0
libtpu: 0.0.40
codegen_flags: <defaults>
</compile_context>

<pallas_src>
import jax
import jax.numpy as jnp
from jax.experimental import pallas as pl
from jax.experimental.pallas import tpu as pltpu


def _round_up(n, m):
    return ((n + m - 1) // m) * m


def _make_center_loss_kernel(batch_size, tile_rows, num_classes):
    def kernel(x_ref, lab_ref, c_ref, out_ref):
        # x_ref:   (TM, D) feature tile (native dtype)
        # lab_ref: (TM, 1) int32 label tile
        # c_ref:   (C, D)  full centers table, resident in VMEM
        # out_ref: (1, 1)  per-tile partial sum (written once per tile)
        x = x_ref[...].astype(jnp.float32)
        c = c_ref[...].astype(jnp.float32)
        lab = lab_ref[...]                                           # (TM, 1)

        # Gather centers[labels] on the MXU with a one-hot matmul.
        # Out-of-range labels produce an all-zero one-hot row (no OOB access).
        classes = jax.lax.broadcasted_iota(
            jnp.int32, (tile_rows, num_classes), 1)                  # (TM, C)
        one_hot = (lab == classes).astype(jnp.float32)               # (TM, C)
        gathered = jnp.dot(one_hot, c,
                           preferred_element_type=jnp.float32)       # (TM, D)

        # Per-row squared distance, kept fused in vregs (XLU lane reduce).
        d = x - gathered
        dist = jnp.sum(d * d, axis=1, keepdims=True)                 # (TM, 1)
        dist = jnp.clip(dist, 1e-12, 1e12)

        # Mask padded batch rows (batch padded up to a multiple of TM).
        row = (pl.program_id(0) * tile_rows
               + jax.lax.broadcasted_iota(jnp.int32, (tile_rows, 1), 0))
        dist = jnp.where(row < batch_size, dist, 0.0)

        # Single write per tile; no accumulator RMW across grid steps.
        out_ref[...] = jnp.sum(dist, keepdims=True)                  # (1, 1)

    return kernel


def center_loss(x, centers, labels, *, tile_rows=128):
    """x: (B, D), centers: (C, D), labels: (B,) int -> scalar f32 loss."""
    B, D = x.shape
    C, Dc = centers.shape
    assert D == Dc

    # Row tile: multiple of 8 sublanes, capped at 128 (or the padded batch).
    TM = min(tile_rows, _round_up(B, 8))
    B_pad = _round_up(B, TM)
    num_tiles = B_pad // TM

    labels = labels.astype(jnp.int32)
    if B_pad != B:
        x = jnp.pad(x, ((0, B_pad - B), (0, 0)))
        labels = jnp.pad(labels, (0, B_pad - B))
    labels2d = labels.reshape(B_pad, 1)

    x_item = jnp.dtype(x.dtype).itemsize
    c_item = jnp.dtype(centers.dtype).itemsize

    # VMEM budget sized from actual buffers (x tile + centers double-buffered,
    # labels tile, output block) plus headroom; clamped to the safe scoped
    # default so it works on v7x's smaller VMEM as well.
    # TODO(synk): for very large class counts (C*D*4 >> 16 MiB) tile the class
    # dimension or keep centers in bf16; not needed at the module's shapes.
    vmem_bytes = (2 * TM * D * x_item
                  + 2 * C * D * c_item
                  + 2 * TM * 4
                  + 2 * 4
                  + (2 << 20))
    vmem_limit = int(min(max(vmem_bytes, 4 << 20), 32 << 20))

    cost = pl.CostEstimate(
        flops=2 * B_pad * C * D + 3 * B_pad * D,   # one-hot matmul + sub/sq/sum
        transcendentals=0,
        bytes_accessed=B_pad * D * x_item + C * D * c_item
        + B_pad * 4 + num_tiles * 4,
    )

    partial = pl.pallas_call(
        _make_center_loss_kernel(B, TM, C),
        out_shape=jax.ShapeDtypeStruct((num_tiles, 1), jnp.float32),
        grid=(num_tiles,),
        in_specs=[
            pl.BlockSpec((TM, D), lambda i: (i, 0)),   # feature row tile
            pl.BlockSpec((TM, 1), lambda i: (i, 0)),   # label tile
            pl.BlockSpec((C, D), lambda i: (0, 0)),    # full centers, VMEM-resident
        ],
        out_specs=pl.BlockSpec((1, 1), lambda i: (i, 0)),
        compiler_params=pltpu.CompilerParams(
            dimension_semantics=("parallel",),
            vmem_limit_bytes=vmem_limit,
        ),
        cost_estimate=cost,
    )(x, labels2d, centers)

    # Mean over the true batch size (matches torch.cat(dist).mean()).
    return jnp.sum(partial) * (1.0 / B)


def center_loss_ref(x, centers, labels):
    """Pure-JAX reference mirroring the PyTorch forward (expanded distmat)."""
    x = x.astype(jnp.float32)
    centers = centers.astype(jnp.float32)
    B = x.shape[0]
    distmat = (
        jnp.sum(x * x, axis=1, keepdims=True)
        + jnp.sum(centers * centers, axis=1, keepdims=True).T
        - 2.0 * x @ centers.T
    )
    sel = distmat[jnp.arange(B), labels]          # distmat[i, labels[i]]
    sel = jnp.clip(sel, 1e-12, 1e12)
    return jnp.mean(sel)


if __name__ == "__main__":
    # Small shapes consistent with the module (num_classes=576, feat_dim=512)
    # scaled down; feat_dim kept lane-dense (multiple of 128).
    batch_size = 8
    num_classes = 32
    feat_dim = 128

    key = jax.random.PRNGKey(0)
    kx, kc, kl = jax.random.split(key, 3)

    x = jax.random.normal(kx, (batch_size, feat_dim), dtype=jnp.float32)
    centers = jax.random.normal(kc, (num_classes, feat_dim), dtype=jnp.float32)
    labels = jax.random.randint(kl, (batch_size,), 0, num_classes, dtype=jnp.int32)

    loss = jax.block_until_ready(center_loss(x, centers, labels))
    ref = jax.block_until_ready(center_loss_ref(x, centers, labels))
    assert jnp.allclose(loss, ref, rtol=1e-4, atol=1e-4), (loss, ref)

    print("KERNEL_OK")
</pallas_src>

<mosaic_0001>
module attributes {stable_mosaic.version = 11 : i64} {
  func.func @kernel(%arg0: i32, %arg1: memref<8x128xf32, #tpu.memory_space<vmem>>, %arg2: memref<8x1xi32, #tpu.memory_space<vmem>>, %arg3: memref<32x128xf32, #tpu.memory_space<vmem>>, %arg4: memref<1x1xf32, #tpu.memory_space<vmem>>) attributes {dimension_semantics = [#tpu.dimension_semantics<parallel>], iteration_bounds = array<i64: 1>, scalar_prefetch = 0 : i64, scratch_operands = 0 : i64, tpu.core_type = #tpu.core_type<tc>, window_params = [{transform_indices = @transform_0, window_bounds = array<i64: 8, 128>}, {transform_indices = @transform_1, window_bounds = array<i64: 8, 1>}, {pipeline_mode = #tpu.pipeline_mode<synchronous>, transform_indices = @transform_2, window_bounds = array<i64: 32, 128>}, {transform_indices = @transform_3, window_bounds = array<i64: 1, 1>}]} {
    %c0 = arith.constant 0 : index
    %c0_0 = arith.constant 0 : index
    %0 = vector.load %arg1[%c0, %c0_0] : memref<8x128xf32, #tpu.memory_space<vmem>>, vector<8x128xf32>
    %c0_1 = arith.constant 0 : index
    %c0_2 = arith.constant 0 : index
    %1 = vector.load %arg3[%c0_1, %c0_2] : memref<32x128xf32, #tpu.memory_space<vmem>>, vector<32x128xf32>
    %c0_3 = arith.constant 0 : index
    %c0_4 = arith.constant 0 : index
    %2 = vector.load %arg2[%c0_3, %c0_4] : memref<8x1xi32, #tpu.memory_space<vmem>>, vector<8x1xi32>
    %3 = tpu.iota {dimensions = array<i32: 1>} : vector<8x32xi32>
    %4 = vector.broadcast %2 : vector<8x1xi32> to vector<8x32xi32>
    %5 = arith.cmpi eq, %4, %3 : vector<8x32xi32>
    %6 = arith.extui %5 : vector<8x32xi1> to vector<8x32xi32>
    %7 = arith.sitofp %6 : vector<8x32xi32> to vector<8x32xf32>
    %cst = arith.constant dense<0.000000e+00> : vector<8x128xf32>
    %8 = tpu.matmul %7, %1, %cst {dimension_numbers = #tpu.dot_dimension_numbers<[1], [0], [0], [1], [0, 0, 1, 1], [], []>} : vector<8x32xf32>, vector<32x128xf32>, vector<8x128xf32> -> vector<8x128xf32>
    %9 = arith.subf %0, %8 : vector<8x128xf32>
    %10 = arith.mulf %9, %9 : vector<8x128xf32>
    %cst_5 = arith.constant dense<0.000000e+00> : vector<8xf32>
    %11 = vector.multi_reduction <add>, %10, %cst_5 [1] : vector<8x128xf32> to vector<8xf32>
    %12 = vector.shape_cast %11 : vector<8xf32> to vector<8x1xf32>
    %cst_6 = arith.constant 9.99999996E-13 : f32
    %cst_7 = arith.constant 9.99999995E+11 : f32
    %13 = vector.broadcast %cst_6 : f32 to vector<8x1xf32>
    %14 = arith.maximumf %13, %12 : vector<8x1xf32>
    %15 = vector.broadcast %cst_7 : f32 to vector<8x1xf32>
    %16 = arith.minimumf %15, %14 : vector<8x1xf32>
    %c8_i32 = arith.constant 8 : i32
    %17 = arith.muli %arg0, %c8_i32 : i32
    %18 = tpu.iota {dimensions = array<i32: 0>} : vector<8x1xi32>
    %19 = vector.broadcast %17 : i32 to vector<8x1xi32>
    %20 = arith.addi %19, %18 : vector<8x1xi32>
    %c8_i32_8 = arith.constant 8 : i32
    %21 = vector.broadcast %c8_i32_8 : i32 to vector<8x1xi32>
    %22 = arith.cmpi slt, %20, %21 : vector<8x1xi32>
    %cst_9 = arith.constant 0.000000e+00 : f32
    %23 = vector.broadcast %cst_9 : f32 to vector<8x1xf32>
    %24 = arith.select %22, %16, %23 : vector<8x1xi1>, vector<8x1xf32>
    %25 = vector.shape_cast %24 : vector<8x1xf32> to vector<1x8x1xf32>
    %cst_10 = arith.constant dense<0.000000e+00> : vector<1xf32>
    %26 = vector.multi_reduction <add>, %25, %cst_10 [1, 2] : vector<1x8x1xf32> to vector<1xf32>
    %27 = vector.shape_cast %26 : vector<1xf32> to vector<1x1x1xf32>
    %28 = vector.extract %27[0, 0, 0] : f32 from vector<1x1x1xf32>
    %29 = vector.broadcast %28 : f32 to vector<1x1xf32>
    %c0_11 = arith.constant 0 : index
    %c0_12 = arith.constant 0 : index
    %30 = vector.load %arg4[%c0_11, %c0_12] : memref<1x1xf32, #tpu.memory_space<vmem>>, vector<1x1xf32>
    tpu.vector_store %arg4[%c0_11, %c0_12], %29 {strides = array<i32>} : memref<1x1xf32, #tpu.memory_space<vmem>>, vector<1x1xf32>,
    return
  }
  func.func @transform_0(%arg0: i32) -> (i32, i32) {
    %c0_i32 = arith.constant 0 : i32
    %c0_i32_0 = arith.constant 0 : i32
    return %arg0, %c0_i32 : i32, i32
  }
  func.func @transform_1(%arg0: i32) -> (i32, i32) {
    %c0_i32 = arith.constant 0 : i32
    %c0_i32_0 = arith.constant 0 : i32
    return %arg0, %c0_i32 : i32, i32
  }
  func.func @transform_2(%arg0: i32) -> (i32, i32) {
    %c0_i32 = arith.constant 0 : i32
    %c0_i32_0 = arith.constant 0 : i32
    %c0_i32_1 = arith.constant 0 : i32
    return %c0_i32, %c0_i32_0 : i32, i32
  }
  func.func @transform_3(%arg0: i32) -> (i32, i32) {
    %c0_i32 = arith.constant 0 : i32
    %c0_i32_0 = arith.constant 0 : i32
    return %arg0, %c0_i32 : i32, i32
  }
}

</mosaic_0001>

<llo_original>
// kernel: tpu_custom_call.1
$region0: #{tpu_custom_call.1}
  #allocation0 [shape = 'u32[]', space=smem, size = 0x4, offset = 0x4, fixed_abs, tag = 'smem constant byte address 0x4 - core index']
  #allocation1 [shape = 'u32[144,128]{1,0:T(1,128)}', space=vmem, size = 0x12000, scoped, tag = 'internal scratch']
  %s0 = inlined_call_operand.vmem [shape: f32[8,128], index: 0, kind: input, shape index: {}]
  %s1 = inlined_call_operand.vmem [shape: s32[8,1], index: 1, kind: input, shape index: {}]
  %s2 = inlined_call_operand.hbm [shape: f32[32,128], index: 2, kind: input, shape index: {}]
  %s3 = inlined_call_operand.hbm [shape: f32[1,1], index: 3, kind: output, shape index: {}]
  %s4 = sld [smem:[#allocation0]]
  $region26: #{tpu_custom_call.1} parent=0
    _
  %s6 = ssub.s32 1, %s4
  %s7 = scalar_select 0, %s6, %s4
  $region1: #{tpu_custom_call.1} parent=0
    #allocation2 [shape = 'u8[16384]{0}', space=vmem, size = 0x4000, scoped, tag = 'input window, operand 2, single buffered']
    #allocation3 [shape = 's32[1]{0}', space=sflag, size = 0x4, scoped, tag = 'scoped memory for tpu_custom_call.1']
    #allocation4 [shape = 's32[1]{0}', space=sflag, size = 0x4, scoped, tag = 'scoped memory for tpu_custom_call.1']
    #allocation5 [shape = 'u8[512]{0}', space=vmem, size = 0x400, scoped, tag = 'output window, operand 0, single buffered']
    %8 = vsyncpa [#allocation3], 0
    %9 = vsyncpa [#allocation4], 0
    // Predicated region
    $region2: #{tpu_custom_call.1} parent=1 // pred_check
      _
    $region3: #{tpu_custom_call.1} parent=1 // pred_check_branch
      %11 = sbr.rel (0) target = $region5
    $region4: #{tpu_custom_call.1} parent=1 // pred_region
      _
    $region5: #{tpu_custom_call.1} parent=1 // pred_fallthru
      _
    // Predicated region
    $region6: #{tpu_custom_call.1} parent=1 // pred_check
      _
    $region7: #{tpu_custom_call.1} parent=1 // pred_check_branch
      %13 = sbr.rel (0) target = $region9
    $region8: #{tpu_custom_call.1} parent=1 // pred_region
      _
    $region9: #{tpu_custom_call.1} parent=1 // pred_fallthru
      _
    // Predicated region
    $region10: #{tpu_custom_call.1} parent=1 // pred_check
      _
    $region11: #{tpu_custom_call.1} parent=1 // pred_check_branch
      %15 = sbr.rel (0) target = $region13
    $region12: #{tpu_custom_call.1} parent=1 // pred_region
      %s17 = ssub.s32 512, 512
      %18 = vsyncadd [#allocation3], %s17
      %s19 = sshll.u32 [#allocation2], 4
      %s20 = int_to_ptr.vmem [resolvable:$true] %s19
      %25 = dma.hbm_to_vmem [thread:$0]  %s2, 512, %s20, [#allocation3], 128, 128, 8
    $region13: #{tpu_custom_call.1} parent=1 // pred_fallthru
      _
    // Predicated region
    $region14: #{tpu_custom_call.1} parent=1 // pred_check
      _
    $region15: #{tpu_custom_call.1} parent=1 // pred_check_branch
      %27 = sbr.rel (0) target = $region17
    $region16: #{tpu_custom_call.1} parent=1 // pred_region
      %28 = dma.done [#allocation3], 512
    $region17: #{tpu_custom_call.1} parent=1 // pred_fallthru
      _
    %v29 = vld [vmem:[%s0] sm:$0xff]
    %v30 = vld [vmem:[#allocation2] sm:$0xff]
    %v31 = vld [vmem:[#allocation2 + $0x8] sm:$0xff]
    %v32 = vld [vmem:[#allocation2 + $0x10] sm:$0xff]
    %v33 = vld [vmem:[#allocation2 + $0x18] sm:$0xff]
    %v34 = vld [vmem:[%s1] sm:$0xff]
    %v35 = vlaneseq
    %v36 = vand.u32 %v35, 127
    %37 = vset.pattern.permute.xlu0 0
    %38 = vperm.xlu0 %37, %v34
    %v39 = vpop.permute.xlu0 %38
    %vm40 = vcmp.eq.s32.totalorder %v39, %v36
    %v41 = vsel %vm40, 1, 0
    %v42 = vcvt.s32.f32 %v41
    %vm43 = vcmask 261120
    %v45 = vsel %vm43, %v42, 0
    %47 = vmatprep.subr.mxu0 0.0
    %48 = vmatpush1.msra.mxu0 %v30
    %49 = vmatprep.subr.mxu0 0.0
    %50 = vmatpush1.msra.mxu0 %v31
    %51 = vmatprep.subr.mxu0 0.0
    %52 = vmatpush1.msra.mxu0 %v32
    %53 = vmatprep.subr.mxu0 0.0
    %54 = vmatpush1.msra.mxu0 %v33
    %55 = vmatprep.subr.mxu0 0.0
    %56 = vmatpush1.msra.mxu0 0.0
    %57 = vmatprep.subr.mxu0 0.0
    %58 = vmatpush1.msra.mxu0 0.0
    %59 = vmatprep.subr.mxu0 0.0
    %60 = vmatpush1.msra.mxu0 0.0
    %61 = vmatprep.subr.mxu0 0.0
    %62 = vmatpush1.msra.mxu0 0.0
    %63 = vmatprep.subr.mxu0 0.0
    %64 = vmatpush1.msra.mxu0 0.0
    %65 = vmatprep.subr.mxu0 0.0
    %66 = vmatpush1.msra.mxu0 0.0
    %67 = vmatprep.subr.mxu0 0.0
    %68 = vmatpush1.msra.mxu0 0.0
    %69 = vmatprep.subr.mxu0 0.0
    %70 = vmatpush1.msra.mxu0 0.0
    %71 = vmatprep.subr.mxu0 0.0
    %72 = vmatpush1.msra.mxu0 0.0
    %73 = vmatprep.subr.mxu0 0.0
    %74 = vmatpush1.msra.mxu0 0.0
    %75 = vmatprep.subr.mxu0 0.0
    %76 = vmatpush1.msra.mxu0 0.0
    %77 = vmatprep.subr.mxu0 0.0
    %78 = vmatpush1.msra.mxu0 0.0
    %79 = vmatprep.subr.mxu0 0.0
    %80 = vmatpush1.msra.mxu0 0.0
    %81 = vmatprep.subr.mxu0 0.0
    %82 = vmatpush1.msra.mxu0 0.0
    %83 = vmatprep.subr.mxu0 0.0
    %84 = vmatpush1.msra.mxu0 0.0
    %85 = vmatprep.subr.mxu0 0.0
    %86 = vmatpush1.msra.mxu0 0.0
    %87 = vmatprep.subr.mxu0 0.0
    %88 = vmatpush1.msra.mxu0 0.0
    %89 = vmatprep.subr.mxu0 0.0
    %90 = vmatpush1.msra.mxu0 0.0
    %91 = vmatprep.subr.mxu0 0.0
    %92 = vmatpush1.msra.mxu0 0.0
    %93 = vmatprep.subr.mxu0 0.0
    %94 = vmatpush1.msra.mxu0 0.0
    %95 = vmatprep.subr.mxu0 0.0
    %96 = vmatpush1.msra.mxu0 0.0
    %97 = vmatprep.subr.mxu0 0.0
    %98 = vmatpush1.msra.mxu0 0.0
    %99 = vmatprep.subr.mxu0 0.0
    %100 = vmatpush1.msra.mxu0 0.0
    %101 = vmatprep.subr.mxu0 0.0
    %102 = vmatpush1.msra.mxu0 0.0
    %103 = vmatprep.subr.mxu0 0.0
    %104 = vmatpush1.msra.mxu0 0.0
    %105 = vmatprep.subr.mxu0 0.0
    %106 = vmatpush1.msra.mxu0 0.0
    %107 = vmatprep.subr.mxu0 0.0
    %108 = vmatpush1.msra.mxu0 0.0
    %109 = vmatprep.subr.mxu0 0.0
    %110 = vmatpush1.msra.mxu0 0.0
    %111 = vmatprep.mubr.f32.mxu0 0.0
    %112 = vmatmul.mubr.f32.gmra.mrb[0].mxu0 %v45
    %v113 = vpop.f32.mrb[0].mxu0
    %v114 = vadd.f32 0.0, %v113
    %v115 = vpop.f32.mrb[0].mxu0
    %116 = vdwg.mxu0
    %v117 = vsub.f32 %v29, %v114
    %v118 = vmul.f32 %v117, %v117
    %119 = vadd.xlane.f32.xlu0 %v118
    %v120 = vpop.xlane.xlu0 %119
    %v121 = vmax.f32 %v120, 1e-12
    %v122 = vmin.f32 %v121, 1e+12
    %s123 = smul.u32 0, 8
    %v124 = vlaneseq
    %v125 = vshrl.u32 %v124, 7
    %v126 = vstv %s123
    %v127 = vadd.s32 %v126, %v125
    %vm128 = vcmp.lt.s32.totalorder %v127, 8
    %v129 = vsel %vm128, %v122, 0.0
    %vm130 = vcmask 7168
    %v131 = vsel %vm130, %v129, 0.0
    %132 = vadd.xlane.f32.xlu0 %v131
    %v133 = vpop.xlane.xlu0 %132
    %v134 = vrot.slane %v133, 4
    %v135 = vadd.f32 %v133, %v134
    %v136 = vrot.slane %v135, 2
    %v137 = vadd.f32 %v135, %v136
    %v138 = vrot.slane %v137, 1
    %v139 = vadd.f32 %v137, %v138
    %s140 = vtos %v139
    %v141 = vstv %s140
    %vm142 = vcmask 0
    %143 = vst.msk [vmem:[#allocation5] sm:$0x1] %vm142, %v141
    // Predicated region
    $region18: #{tpu_custom_call.1} parent=1 // pred_check
      _
    $region19: #{tpu_custom_call.1} parent=1 // pred_check_branch
      %145 = sbr.rel (0) target = $region21
    $region20: #{tpu_custom_call.1} parent=1 // pred_region
      %s147 = ssub.s32 16, 16
      %148 = vsyncadd [#allocation4], %s147
      %s150 = sshll.u32 [#allocation5], 4
      %s151 = int_to_ptr.vmem [resolvable:$true] %s150
      %153 = dma.vmem_to_hbm [thread:$0]  %s151, 16, %s3, [#allocation4]
    $region21: #{tpu_custom_call.1} parent=1 // pred_fallthru
      _
    // Predicated region
    $region22: #{tpu_custom_call.1} parent=1 // pred_check
      _
    $region23: #{tpu_custom_call.1} parent=1 // pred_check_branch
      %155 = sbr.rel (0) target = $region25
    $region24: #{tpu_custom_call.1} parent=1 // pred_region
      %156 = dma.done [#allocation4], 16
    $region25: #{tpu_custom_call.1} parent=1 // pred_fallthru
      _
    %157 = vsyncpa [#allocation3], 1
    %158 = vsyncpa [#allocation4], 1

</llo_original>
